<compile_context>
chip_gen: v7x
topology: tpu7x:2x2x1
jax: 0.10.0
libtpu: 0.0.40
codegen_flags: <defaults>
</compile_context>

<pallas_src>
import functools

import numpy as np
import jax
import jax.numpy as jnp
from jax import lax
from jax.experimental import pallas as pl
from jax.experimental.pallas import tpu as pltpu

SMOOTH = 1.0
LAMBDA_SMOOTH = 0.1
CENTER_WEIGHT_FACTOR = 1.6


def _shift_right(a, k, fill, pos):
    """result[:, i] = a[:, i-k] for i >= k, else `fill` (pltpu.roll == jnp.roll semantics)."""
    return jnp.where(pos >= k, pltpu.roll(a, k, axis=1), fill)


def _shift_left(a, k, fill, pos):
    """result[:, i] = a[:, i+k] for i < W-k, else `fill`."""
    w = a.shape[-1]
    return jnp.where(pos < w - k, pltpu.roll(a, w - k, axis=1), fill)


def _wcl_kernel(x_ref, t_ref, out_ref, *, valid_rows=None):
    """One batch tile.  Writes 5 lane-partial rows into the (5, W) output block:
       [0] sum(weight*bce)  [1] sum(sigmoid)  [2] sum(target)
       [3] sum(sigmoid*target)  [4] sum(|x[:,i]-x[:,i-1]|),
       each reduced over the tile's batch rows only (lane reduction done in the wrapper)."""
    x = x_ref[...].astype(jnp.float32)      # (Bt, W) logits
    tf = t_ref[...].astype(jnp.float32)     # (Bt, W) labels as f32
    Bt, W = x.shape

    pos = lax.broadcasted_iota(jnp.int32, (Bt, W), 1).astype(jnp.float32)
    nz = tf != 0.0
    nz_f = nz.astype(jnp.float32)

    # ---- compute_weight: gesture-run boundaries via roll-based shifts -------------------
    # TODO(synk): the scan state could run in bf16 on v6e/v7x (values are small exact ints)
    #             to halve XLU/VALU vreg ops; kept f32 so the same kernel is optimal on v5e.
    prev_nz = _shift_right(nz_f, 1, 0.0, pos)   # label to the left (0 outside window)
    next_nz = _shift_left(nz_f, 1, 0.0, pos)    # label to the right
    is_start = nz & (prev_nz == 0.0)            # first position of each nonzero run
    is_end = nz & (next_nz == 0.0)              # last position of each nonzero run

    # prefix-max of start positions / suffix-min of end positions: log2(W) roll steps.
    start_idx = jnp.where(is_start, pos, -1.0)
    end_idx = jnp.where(is_end, pos, float(W))
    shift = 1
    while shift < W:
        start_idx = jnp.maximum(start_idx, _shift_right(start_idx, shift, -1.0, pos))
        end_idx = jnp.minimum(end_idx, _shift_left(end_idx, shift, float(W), pos))
        shift *= 2

    length = end_idx - start_idx + 1.0
    # == floor(length / 6) for these small non-negative integer lengths; the +0.5
    # guard keeps it exact even under a reciprocal-multiply rewrite of the division.
    sixth = jnp.floor((length + 0.5) * (1.0 / 6.0))
    contained = (start_idx > 0.0) & (end_idx < float(W - 1))
    in_center = (pos >= start_idx + sixth) & (pos <= end_idx - sixth)
    weight = jnp.where(nz & contained & in_center,
                       jnp.float32(CENTER_WEIGHT_FACTOR), jnp.float32(1.0))

    # ---- weighted BCE-with-logits + sigmoid, sharing e = exp(-|x|) ----------------------
    # TODO(synk): exp/log/reciprocal could run in bf16 on v6e/v7x if the EUP saturates.
    e = jnp.exp(-jnp.abs(x))
    bce_el = jnp.maximum(x, 0.0) - x * tf + jnp.log(1.0 + e)
    sig = jnp.where(x >= 0.0, 1.0, e) * pl.reciprocal(1.0 + e, approx=True)

    # ---- continuity: |x[:, i] - x[:, i-1]| for i >= 1 -----------------------------------
    dif = jnp.where(pos >= 1.0, jnp.abs(x - pltpu.roll(x, 1, axis=1)), 0.0)

    wbce = weight * bce_el
    inter = sig * tf

    # Only the single-tile ragged tail call is compiled with masking; full tiles pay nothing.
    if valid_rows is not None:
        row = lax.broadcasted_iota(jnp.int32, (Bt, W), 0)
        rv = (row < valid_rows).astype(jnp.float32)
        wbce, sig, tf, inter, dif = rv * wbce, rv * sig, rv * tf, rv * inter, rv * dif

    # ---- lane-dense partial rows (batch-axis reduction only) ----------------------------
    out_ref[0:1, :] = jnp.sum(wbce, axis=0, keepdims=True)
    out_ref[1:2, :] = jnp.sum(sig, axis=0, keepdims=True)
    out_ref[2:3, :] = jnp.sum(tf, axis=0, keepdims=True)
    out_ref[3:4, :] = jnp.sum(inter, axis=0, keepdims=True)
    out_ref[4:5, :] = jnp.sum(dif, axis=0, keepdims=True)


def _partials(x, t, b_tile, num_tiles, valid_rows=None):
    """Launch the kernel over `num_tiles` batch tiles of `b_tile` rows.  The arrays may be
    larger than num_tiles*b_tile; only the indexed full tiles are read."""
    W = x.shape[1]
    return pl.pallas_call(
        functools.partial(_wcl_kernel, valid_rows=valid_rows),
        out_shape=jax.ShapeDtypeStruct((num_tiles, 5, W), jnp.float32),
        grid=(num_tiles,),
        in_specs=[
            pl.BlockSpec((b_tile, W), lambda i: (i, 0)),
            pl.BlockSpec((b_tile, W), lambda i: (i, 0)),
        ],
        out_specs=pl.BlockSpec((None, 5, W), lambda i: (i, 0, 0)),
        compiler_params=pltpu.CompilerParams(dimension_semantics=("parallel",)),
    )(x, t)


def weighted_center_loss(inputs, target, *, b_tile=256):
    """inputs: (B, W) or (B, 1, W) float logits; target: (B, W) labels.  Scalar loss."""
    if inputs.ndim == 3 and inputs.shape[1] == 1:
        inputs = inputs[:, 0, :]
    if target.shape != inputs.shape:
        target = target.reshape(inputs.shape)
    B, W = inputs.shape
    assert W % 128 == 0, "window dim must be a multiple of 128 (TPU lane width)"

    if not jnp.issubdtype(inputs.dtype, jnp.floating):
        inputs = inputs.astype(jnp.float32)
    if jnp.issubdtype(target.dtype, jnp.floating):
        target = target.astype(jnp.float32)
    else:
        # int8 labels: 4x less label DMA / VMEM than int32.
        # TODO(synk): assumes class ids fit in int8 (semantics are only exact for 0/1 labels).
        target = target.astype(jnp.int8)

    # Tile rows: multiple of 32 so f32 / bf16 / int8 sublane packing are all block-aligned.
    b_tile = max(32, (b_tile // 32) * 32)
    full_tiles = B // b_tile
    rem = B - full_tiles * b_tile

    parts = []
    if full_tiles > 0:
        # Full arrays passed unsliced and unpadded; the grid only indexes the full tiles.
        parts.append(_partials(inputs, target, b_tile, full_tiles))
    if rem > 0:
        # Ragged remainder: pad only the < b_tile tail slice and mask it inside the kernel.
        start = full_tiles * b_tile
        pad_rows = ((rem + 31) // 32) * 32
        x_tail = jnp.pad(inputs[start:], ((0, pad_rows - rem), (0, 0)))
        t_tail = jnp.pad(target[start:], ((0, pad_rows - rem), (0, 0)))
        parts.append(_partials(x_tail, t_tail, pad_rows, 1, valid_rows=rem))

    # Tiny cross-tile + cross-lane reduction of the partial rows.
    p = sum(jnp.sum(q, axis=(0, 2)) for q in parts)      # (5,)
    s_wbce, s_sig, s_t, s_int, s_cont = p[0], p[1], p[2], p[3], p[4]
    bce = s_wbce / (B * W)
    dice = 1.0 - (2.0 * s_int + SMOOTH) / (s_sig + s_t + SMOOTH)
    cont = s_cont / (B * (W - 1))
    return bce + dice + LAMBDA_SMOOTH * cont


# --------------------------- host-side reference (numpy) -------------------------------
def _ref_loss(inputs_np, target_np, smooth=SMOOTH, lambda_smooth=LAMBDA_SMOOTH):
    B, W = target_np.shape
    weight = np.ones((B, W), dtype=np.float64)
    for b in range(B):
        lab = target_np[b]
        padded = np.concatenate([[0], lab, [0]])
        changes = np.where(padded[1:] != padded[:-1])[0]
        for i in range(0, len(changes), 2):
            if i + 1 >= len(changes):
                break
            gs = int(changes[i])
            ge_ = int(changes[i + 1]) - 1
            if lab[gs] == 0:
                continue
            if gs > 0 and ge_ < W - 1:
                gl = ge_ - gs + 1
                cs = gs + gl // 6
                ce = ge_ - gl // 6
                weight[b, cs:ce + 1] = CENTER_WEIGHT_FACTOR
    x = inputs_np.astype(np.float64)
    t = target_np.astype(np.float64)
    bce_el = np.maximum(x, 0.0) - x * t + np.log1p(np.exp(-np.abs(x)))
    bce = np.mean(weight * bce_el)
    sig = 1.0 / (1.0 + np.exp(-x))
    inter = np.sum(sig * t)
    dice = 1.0 - (2.0 * inter + smooth) / (sig.sum() + t.sum() + smooth)
    cont = np.mean(np.abs(x[:, 1:] - x[:, :-1]))
    return bce + dice + lambda_smooth * cont


if __name__ == "__main__":
    key = jax.random.PRNGKey(0)
    W = 128
    base = np.zeros((12, W), dtype=np.int32)
    base[0, 10:30] = 1    # fully contained gesture
    base[0, 50:60] = 1    # fully contained gesture
    base[1, 0:20] = 1     # touches window start -> not center-weighted
    base[1, 40:80] = 1    # fully contained
    base[2, 5:15] = 1     # fully contained
    base[2, 100:128] = 1  # touches window end -> not center-weighted
    base[4, 64:71] = 1    # short contained gesture
    base[5, 1:127] = 1    # nearly full-window, still contained
    base[7, 30:31] = 1    # length-1 gesture
    base[9, 0:128] = 1    # full-window gesture -> not contained
    # rows 3, 6, 8, 10, 11 of each copy: no gestures
    tgt = np.tile(base, (6, 1))          # B = 72 -> 2 full tiles of 32 + ragged tail of 8
    B = tgt.shape[0]
    x = jax.random.normal(key, (B, W), dtype=jnp.float32)
    target = jnp.asarray(tgt)

    ref = _ref_loss(np.asarray(x), tgt)

    # small explicit tile: exercises the multi-tile "full" path AND the masked tail path
    loss = jax.block_until_ready(weighted_center_loss(x, target, b_tile=32))
    assert abs(float(loss) - float(ref)) < 2e-3, (float(loss), float(ref))

    # default tile (256 > B): whole batch goes through the single masked tail-tile path
    loss2 = jax.block_until_ready(weighted_center_loss(x, target))
    assert abs(float(loss2) - float(ref)) < 2e-3, (float(loss2), float(ref))

    print("KERNEL_OK")
</pallas_src>

<mosaic_0001>
module attributes {stable_mosaic.version = 11 : i64} {
  func.func @_wcl_kernel(%arg0: i32, %arg1: memref<32x128xf32, #tpu.memory_space<vmem>>, %arg2: memref<32x128xi8, #tpu.memory_space<vmem>>, %arg3: memref<1x5x128xf32, #tpu.memory_space<vmem>>) attributes {dimension_semantics = [#tpu.dimension_semantics<parallel>], iteration_bounds = array<i64: 2>, scalar_prefetch = 0 : i64, scratch_operands = 0 : i64, tpu.core_type = #tpu.core_type<tc>, window_params = [{transform_indices = @transform_0, window_bounds = array<i64: 32, 128>}, {transform_indices = @transform_1, window_bounds = array<i64: 32, 128>}, {transform_indices = @transform_2, window_bounds = array<i64: 1, 5, 128>}]} {
    %c0 = arith.constant 0 : index
    %c0_0 = arith.constant 0 : index
    %0 = vector.load %arg1[%c0, %c0_0] : memref<32x128xf32, #tpu.memory_space<vmem>>, vector<32x128xf32>
    %c0_1 = arith.constant 0 : index
    %c0_2 = arith.constant 0 : index
    %1 = vector.load %arg2[%c0_1, %c0_2] : memref<32x128xi8, #tpu.memory_space<vmem>>, vector<32x128xi8>
    %2 = arith.sitofp %1 : vector<32x128xi8> to vector<32x128xf32>
    %3 = tpu.iota {dimensions = array<i32: 1>} : vector<32x128xi32>
    %4 = arith.sitofp %3 : vector<32x128xi32> to vector<32x128xf32>
    %cst = arith.constant 0.000000e+00 : f32
    %5 = vector.broadcast %cst : f32 to vector<32x128xf32>
    %6 = arith.cmpf one, %2, %5 : vector<32x128xf32>
    %7 = arith.extui %6 : vector<32x128xi1> to vector<32x128xi32>
    %8 = arith.sitofp %7 : vector<32x128xi32> to vector<32x128xf32>
    %cst_3 = arith.constant 1.000000e+00 : f32
    %9 = vector.broadcast %cst_3 : f32 to vector<32x128xf32>
    %10 = arith.cmpf oge, %4, %9 : vector<32x128xf32>
    %c1_i32 = arith.constant 1 : i32
    %11 = tpu.dynamic_rotate %8 by %c1_i32 dim 1 : vector<32x128xf32>, i32 -> vector<32x128xf32>
    %cst_4 = arith.constant 0.000000e+00 : f32
    %12 = vector.broadcast %cst_4 : f32 to vector<32x128xf32>
    %13 = arith.select %10, %11, %12 : vector<32x128xi1>, vector<32x128xf32>
    %cst_5 = arith.constant 1.270000e+02 : f32
    %14 = vector.broadcast %cst_5 : f32 to vector<32x128xf32>
    %15 = arith.cmpf olt, %4, %14 : vector<32x128xf32>
    %c127_i32 = arith.constant 127 : i32
    %16 = tpu.dynamic_rotate %8 by %c127_i32 dim 1 : vector<32x128xf32>, i32 -> vector<32x128xf32>
    %cst_6 = arith.constant 0.000000e+00 : f32
    %17 = vector.broadcast %cst_6 : f32 to vector<32x128xf32>
    %18 = arith.select %15, %16, %17 : vector<32x128xi1>, vector<32x128xf32>
    %cst_7 = arith.constant 0.000000e+00 : f32
    %19 = vector.broadcast %cst_7 : f32 to vector<32x128xf32>
    %20 = arith.cmpf oeq, %13, %19 : vector<32x128xf32>
    %21 = arith.andi %6, %20 : vector<32x128xi1>
    %cst_8 = arith.constant 0.000000e+00 : f32
    %22 = vector.broadcast %cst_8 : f32 to vector<32x128xf32>
    %23 = arith.cmpf oeq, %18, %22 : vector<32x128xf32>
    %24 = arith.andi %6, %23 : vector<32x128xi1>
    %cst_9 = arith.constant -1.000000e+00 : f32
    %25 = vector.broadcast %cst_9 : f32 to vector<32x128xf32>
    %26 = arith.select %21, %4, %25 : vector<32x128xi1>, vector<32x128xf32>
    %cst_10 = arith.constant 1.280000e+02 : f32
    %27 = vector.broadcast %cst_10 : f32 to vector<32x128xf32>
    %28 = arith.select %24, %4, %27 : vector<32x128xi1>, vector<32x128xf32>
    %cst_11 = arith.constant 1.000000e+00 : f32
    %29 = vector.broadcast %cst_11 : f32 to vector<32x128xf32>
    %30 = arith.cmpf oge, %4, %29 : vector<32x128xf32>
    %c1_i32_12 = arith.constant 1 : i32
    %31 = tpu.dynamic_rotate %26 by %c1_i32_12 dim 1 : vector<32x128xf32>, i32 -> vector<32x128xf32>
    %cst_13 = arith.constant -1.000000e+00 : f32
    %32 = vector.broadcast %cst_13 : f32 to vector<32x128xf32>
    %33 = arith.select %30, %31, %32 : vector<32x128xi1>, vector<32x128xf32>
    %34 = arith.maximumf %26, %33 : vector<32x128xf32>
    %cst_14 = arith.constant 1.270000e+02 : f32
    %35 = vector.broadcast %cst_14 : f32 to vector<32x128xf32>
    %36 = arith.cmpf olt, %4, %35 : vector<32x128xf32>
    %c127_i32_15 = arith.constant 127 : i32
    %37 = tpu.dynamic_rotate %28 by %c127_i32_15 dim 1 : vector<32x128xf32>, i32 -> vector<32x128xf32>
    %cst_16 = arith.constant 1.280000e+02 : f32
    %38 = vector.broadcast %cst_16 : f32 to vector<32x128xf32>
    %39 = arith.select %36, %37, %38 : vector<32x128xi1>, vector<32x128xf32>
    %40 = arith.minimumf %28, %39 : vector<32x128xf32>
    %cst_17 = arith.constant 2.000000e+00 : f32
    %41 = vector.broadcast %cst_17 : f32 to vector<32x128xf32>
    %42 = arith.cmpf oge, %4, %41 : vector<32x128xf32>
    %c2_i32 = arith.constant 2 : i32
    %43 = tpu.dynamic_rotate %34 by %c2_i32 dim 1 : vector<32x128xf32>, i32 -> vector<32x128xf32>
    %cst_18 = arith.constant -1.000000e+00 : f32
    %44 = vector.broadcast %cst_18 : f32 to vector<32x128xf32>
    %45 = arith.select %42, %43, %44 : vector<32x128xi1>, vector<32x128xf32>
    %46 = arith.maximumf %34, %45 : vector<32x128xf32>
    %cst_19 = arith.constant 1.260000e+02 : f32
    %47 = vector.broadcast %cst_19 : f32 to vector<32x128xf32>
    %48 = arith.cmpf olt, %4, %47 : vector<32x128xf32>
    %c126_i32 = arith.constant 126 : i32
    %49 = tpu.dynamic_rotate %40 by %c126_i32 dim 1 : vector<32x128xf32>, i32 -> vector<32x128xf32>
    %cst_20 = arith.constant 1.280000e+02 : f32
    %50 = vector.broadcast %cst_20 : f32 to vector<32x128xf32>
    %51 = arith.select %48, %49, %50 : vector<32x128xi1>, vector<32x128xf32>
    %52 = arith.minimumf %40, %51 : vector<32x128xf32>
    %cst_21 = arith.constant 4.000000e+00 : f32
    %53 = vector.broadcast %cst_21 : f32 to vector<32x128xf32>
    %54 = arith.cmpf oge, %4, %53 : vector<32x128xf32>
    %c4_i32 = arith.constant 4 : i32
    %55 = tpu.dynamic_rotate %46 by %c4_i32 dim 1 : vector<32x128xf32>, i32 -> vector<32x128xf32>
    %cst_22 = arith.constant -1.000000e+00 : f32
    %56 = vector.broadcast %cst_22 : f32 to vector<32x128xf32>
    %57 = arith.select %54, %55, %56 : vector<32x128xi1>, vector<32x128xf32>
    %58 = arith.maximumf %46, %57 : vector<32x128xf32>
    %cst_23 = arith.constant 1.240000e+02 : f32
    %59 = vector.broadcast %cst_23 : f32 to vector<32x128xf32>
    %60 = arith.cmpf olt, %4, %59 : vector<32x128xf32>
    %c124_i32 = arith.constant 124 : i32
    %61 = tpu.dynamic_rotate %52 by %c124_i32 dim 1 : vector<32x128xf32>, i32 -> vector<32x128xf32>
    %cst_24 = arith.constant 1.280000e+02 : f32
    %62 = vector.broadcast %cst_24 : f32 to vector<32x128xf32>
    %63 = arith.select %60, %61, %62 : vector<32x128xi1>, vector<32x128xf32>
    %64 = arith.minimumf %52, %63 : vector<32x128xf32>
    %cst_25 = arith.constant 8.000000e+00 : f32
    %65 = vector.broadcast %cst_25 : f32 to vector<32x128xf32>
    %66 = arith.cmpf oge, %4, %65 : vector<32x128xf32>
    %c8_i32 = arith.constant 8 : i32
    %67 = tpu.dynamic_rotate %58 by %c8_i32 dim 1 : vector<32x128xf32>, i32 -> vector<32x128xf32>
    %cst_26 = arith.constant -1.000000e+00 : f32
    %68 = vector.broadcast %cst_26 : f32 to vector<32x128xf32>
    %69 = arith.select %66, %67, %68 : vector<32x128xi1>, vector<32x128xf32>
    %70 = arith.maximumf %58, %69 : vector<32x128xf32>
    %cst_27 = arith.constant 1.200000e+02 : f32
    %71 = vector.broadcast %cst_27 : f32 to vector<32x128xf32>
    %72 = arith.cmpf olt, %4, %71 : vector<32x128xf32>
    %c120_i32 = arith.constant 120 : i32
    %73 = tpu.dynamic_rotate %64 by %c120_i32 dim 1 : vector<32x128xf32>, i32 -> vector<32x128xf32>
    %cst_28 = arith.constant 1.280000e+02 : f32
    %74 = vector.broadcast %cst_28 : f32 to vector<32x128xf32>
    %75 = arith.select %72, %73, %74 : vector<32x128xi1>, vector<32x128xf32>
    %76 = arith.minimumf %64, %75 : vector<32x128xf32>
    %cst_29 = arith.constant 1.600000e+01 : f32
    %77 = vector.broadcast %cst_29 : f32 to vector<32x128xf32>
    %78 = arith.cmpf oge, %4, %77 : vector<32x128xf32>
    %c16_i32 = arith.constant 16 : i32
    %79 = tpu.dynamic_rotate %70 by %c16_i32 dim 1 : vector<32x128xf32>, i32 -> vector<32x128xf32>
    %cst_30 = arith.constant -1.000000e+00 : f32
    %80 = vector.broadcast %cst_30 : f32 to vector<32x128xf32>
    %81 = arith.select %78, %79, %80 : vector<32x128xi1>, vector<32x128xf32>
    %82 = arith.maximumf %70, %81 : vector<32x128xf32>
    %cst_31 = arith.constant 1.120000e+02 : f32
    %83 = vector.broadcast %cst_31 : f32 to vector<32x128xf32>
    %84 = arith.cmpf olt, %4, %83 : vector<32x128xf32>
    %c112_i32 = arith.constant 112 : i32
    %85 = tpu.dynamic_rotate %76 by %c112_i32 dim 1 : vector<32x128xf32>, i32 -> vector<32x128xf32>
    %cst_32 = arith.constant 1.280000e+02 : f32
    %86 = vector.broadcast %cst_32 : f32 to vector<32x128xf32>
    %87 = arith.select %84, %85, %86 : vector<32x128xi1>, vector<32x128xf32>
    %88 = arith.minimumf %76, %87 : vector<32x128xf32>
    %cst_33 = arith.constant 3.200000e+01 : f32
    %89 = vector.broadcast %cst_33 : f32 to vector<32x128xf32>
    %90 = arith.cmpf oge, %4, %89 : vector<32x128xf32>
    %c32_i32 = arith.constant 32 : i32
    %91 = tpu.dynamic_rotate %82 by %c32_i32 dim 1 : vector<32x128xf32>, i32 -> vector<32x128xf32>
    %cst_34 = arith.constant -1.000000e+00 : f32
    %92 = vector.broadcast %cst_34 : f32 to vector<32x128xf32>
    %93 = arith.select %90, %91, %92 : vector<32x128xi1>, vector<32x128xf32>
    %94 = arith.maximumf %82, %93 : vector<32x128xf32>
    %cst_35 = arith.constant 9.600000e+01 : f32
    %95 = vector.broadcast %cst_35 : f32 to vector<32x128xf32>
    %96 = arith.cmpf olt, %4, %95 : vector<32x128xf32>
    %c96_i32 = arith.constant 96 : i32
    %97 = tpu.dynamic_rotate %88 by %c96_i32 dim 1 : vector<32x128xf32>, i32 -> vector<32x128xf32>
    %cst_36 = arith.constant 1.280000e+02 : f32
    %98 = vector.broadcast %cst_36 : f32 to vector<32x128xf32>
    %99 = arith.select %96, %97, %98 : vector<32x128xi1>, vector<32x128xf32>
    %100 = arith.minimumf %88, %99 : vector<32x128xf32>
    %cst_37 = arith.constant 6.400000e+01 : f32
    %101 = vector.broadcast %cst_37 : f32 to vector<32x128xf32>
    %102 = arith.cmpf oge, %4, %101 : vector<32x128xf32>
    %c64_i32 = arith.constant 64 : i32
    %103 = tpu.dynamic_rotate %94 by %c64_i32 dim 1 : vector<32x128xf32>, i32 -> vector<32x128xf32>
    %cst_38 = arith.constant -1.000000e+00 : f32
    %104 = vector.broadcast %cst_38 : f32 to vector<32x128xf32>
    %105 = arith.select %102, %103, %104 : vector<32x128xi1>, vector<32x128xf32>
    %106 = arith.maximumf %94, %105 : vector<32x128xf32>
    %cst_39 = arith.constant 6.400000e+01 : f32
    %107 = vector.broadcast %cst_39 : f32 to vector<32x128xf32>
    %108 = arith.cmpf olt, %4, %107 : vector<32x128xf32>
    %c64_i32_40 = arith.constant 64 : i32
    %109 = tpu.dynamic_rotate %100 by %c64_i32_40 dim 1 : vector<32x128xf32>, i32 -> vector<32x128xf32>
    %cst_41 = arith.constant 1.280000e+02 : f32
    %110 = vector.broadcast %cst_41 : f32 to vector<32x128xf32>
    %111 = arith.select %108, %109, %110 : vector<32x128xi1>, vector<32x128xf32>
    %112 = arith.minimumf %100, %111 : vector<32x128xf32>
    %113 = arith.subf %112, %106 : vector<32x128xf32>
    %cst_42 = arith.constant 1.000000e+00 : f32
    %114 = vector.broadcast %cst_42 : f32 to vector<32x128xf32>
    %115 = arith.addf %113, %114 : vector<32x128xf32>
    %cst_43 = arith.constant 5.000000e-01 : f32
    %116 = vector.broadcast %cst_43 : f32 to vector<32x128xf32>
    %117 = arith.addf %115, %116 : vector<32x128xf32>
    %cst_44 = arith.constant 0.166666672 : f32
    %118 = vector.broadcast %cst_44 : f32 to vector<32x128xf32>
    %119 = arith.mulf %117, %118 : vector<32x128xf32>
    %120 = math.floor %119 : vector<32x128xf32>
    %cst_45 = arith.constant 0.000000e+00 : f32
    %121 = vector.broadcast %cst_45 : f32 to vector<32x128xf32>
    %122 = arith.cmpf ogt, %106, %121 : vector<32x128xf32>
    %cst_46 = arith.constant 1.270000e+02 : f32
    %123 = vector.broadcast %cst_46 : f32 to vector<32x128xf32>
    %124 = arith.cmpf olt, %112, %123 : vector<32x128xf32>
    %125 = arith.andi %122, %124 : vector<32x128xi1>
    %126 = arith.addf %106, %120 : vector<32x128xf32>
    %127 = arith.cmpf oge, %4, %126 : vector<32x128xf32>
    %128 = arith.subf %112, %120 : vector<32x128xf32>
    %129 = arith.cmpf ole, %4, %128 : vector<32x128xf32>
    %130 = arith.andi %127, %129 : vector<32x128xi1>
    %131 = arith.andi %6, %125 : vector<32x128xi1>
    %132 = arith.andi %131, %130 : vector<32x128xi1>
    %cst_47 = arith.constant 1.600000e+00 : f32
    %cst_48 = arith.constant 1.000000e+00 : f32
    %133 = vector.broadcast %cst_47 : f32 to vector<32x128xf32>
    %134 = vector.broadcast %cst_48 : f32 to vector<32x128xf32>
    %135 = arith.select %132, %133, %134 : vector<32x128xi1>, vector<32x128xf32>
    %136 = math.absf %0 : vector<32x128xf32>
    %cst_49 = arith.constant 0.000000e+00 : f32
    %137 = vector.broadcast %cst_49 : f32 to vector<32x128xf32>
    %138 = arith.subf %137, %136 : vector<32x128xf32>
    %139 = math.exp %138 : vector<32x128xf32>
    %cst_50 = arith.constant 0.000000e+00 : f32
    %140 = vector.broadcast %cst_50 : f32 to vector<32x128xf32>
    %141 = arith.maximumf %0, %140 : vector<32x128xf32>
    %142 = arith.mulf %0, %2 : vector<32x128xf32>
    %143 = arith.subf %141, %142 : vector<32x128xf32>
    %cst_51 = arith.constant 1.000000e+00 : f32
    %144 = vector.broadcast %cst_51 : f32 to vector<32x128xf32>
    %145 = arith.addf %144, %139 : vector<32x128xf32>
    %146 = math.log %145 : vector<32x128xf32>
    %147 = arith.addf %143, %146 : vector<32x128xf32>
    %cst_52 = arith.constant 0.000000e+00 : f32
    %148 = vector.broadcast %cst_52 : f32 to vector<32x128xf32>
    %149 = arith.cmpf oge, %0, %148 : vector<32x128xf32>
    %cst_53 = arith.constant 1.000000e+00 : f32
    %150 = vector.broadcast %cst_53 : f32 to vector<32x128xf32>
    %151 = arith.select %149, %150, %139 : vector<32x128xi1>, vector<32x128xf32>
    %cst_54 = arith.constant 1.000000e+00 : f32
    %152 = vector.broadcast %cst_54 : f32 to vector<32x128xf32>
    %153 = arith.addf %152, %139 : vector<32x128xf32>
    %154 = tpu.reciprocal %153 {approx = true} : vector<32x128xf32> -> vector<32x128xf32>
    %155 = arith.mulf %151, %154 : vector<32x128xf32>
    %cst_55 = arith.constant 1.000000e+00 : f32
    %156 = vector.broadcast %cst_55 : f32 to vector<32x128xf32>
    %157 = arith.cmpf oge, %4, %156 : vector<32x128xf32>
    %c1_i32_56 = arith.constant 1 : i32
    %158 = tpu.dynamic_rotate %0 by %c1_i32_56 dim 1 : vector<32x128xf32>, i32 -> vector<32x128xf32>
    %159 = arith.subf %0, %158 : vector<32x128xf32>
    %160 = math.absf %159 : vector<32x128xf32>
    %cst_57 = arith.constant 0.000000e+00 : f32
    %161 = vector.broadcast %cst_57 : f32 to vector<32x128xf32>
    %162 = arith.select %157, %160, %161 : vector<32x128xi1>, vector<32x128xf32>
    %163 = arith.mulf %135, %147 : vector<32x128xf32>
    %164 = arith.mulf %155, %2 : vector<32x128xf32>
    %cst_58 = arith.constant dense<0.000000e+00> : vector<128xf32>
    %165 = vector.multi_reduction <add>, %163, %cst_58 [0] : vector<32x128xf32> to vector<128xf32>
    %166 = vector.shape_cast %165 : vector<128xf32> to vector<1x128xf32>
    %c0_59 = arith.constant 0 : index
    %c0_60 = arith.constant 0 : index
    %c0_61 = arith.constant 0 : index
    %167 = vector.load %arg3[%c0_59, %c0_60, %c0_61] : memref<1x5x128xf32, #tpu.memory_space<vmem>>, vector<1x1x128xf32>
    %168 = vector.shape_cast %167 : vector<1x1x128xf32> to vector<1x128xf32>
    %169 = vector.shape_cast %166 : vector<1x128xf32> to vector<1x1x128xf32>
    tpu.vector_store %arg3[%c0_59, %c0_60, %c0_61], %169 {strides = array<i32>} : memref<1x5x128xf32, #tpu.memory_space<vmem>>, vector<1x1x128xf32>,
    %cst_62 = arith.constant dense<0.000000e+00> : vector<128xf32>
    %170 = vector.multi_reduction <add>, %155, %cst_62 [0] : vector<32x128xf32> to vector<128xf32>
    %171 = vector.shape_cast %170 : vector<128xf32> to vector<1x128xf32>
    %c0_63 = arith.constant 0 : index
    %c1 = arith.constant 1 : index
    %c0_64 = arith.constant 0 : index
    %172 = vector.load %arg3[%c0_63, %c1, %c0_64] : memref<1x5x128xf32, #tpu.memory_space<vmem>>, vector<1x1x128xf32>
    %173 = vector.shape_cast %172 : vector<1x1x128xf32> to vector<1x128xf32>
    %174 = vector.shape_cast %171 : vector<1x128xf32> to vector<1x1x128xf32>
    tpu.vector_store %arg3[%c0_63, %c1, %c0_64], %174 {strides = array<i32>} : memref<1x5x128xf32, #tpu.memory_space<vmem>>, vector<1x1x128xf32>,
    %cst_65 = arith.constant dense<0.000000e+00> : vector<128xf32>
    %175 = vector.multi_reduction <add>, %2, %cst_65 [0] : vector<32x128xf32> to vector<128xf32>
    %176 = vector.shape_cast %175 : vector<128xf32> to vector<1x128xf32>
    %c0_66 = arith.constant 0 : index
    %c2 = arith.constant 2 : index
    %c0_67 = arith.constant 0 : index
    %177 = vector.load %arg3[%c0_66, %c2, %c0_67] : memref<1x5x128xf32, #tpu.memory_space<vmem>>, vector<1x1x128xf32>
    %178 = vector.shape_cast %177 : vector<1x1x128xf32> to vector<1x128xf32>
    %179 = vector.shape_cast %176 : vector<1x128xf32> to vector<1x1x128xf32>
    tpu.vector_store %arg3[%c0_66, %c2, %c0_67], %179 {strides = array<i32>} : memref<1x5x128xf32, #tpu.memory_space<vmem>>, vector<1x1x128xf32>,
    %cst_68 = arith.constant dense<0.000000e+00> : vector<128xf32>
    %180 = vector.multi_reduction <add>, %164, %cst_68 [0] : vector<32x128xf32> to vector<128xf32>
    %181 = vector.shape_cast %180 : vector<128xf32> to vector<1x128xf32>
    %c0_69 = arith.constant 0 : index
    %c3 = arith.constant 3 : index
    %c0_70 = arith.constant 0 : index
    %182 = vector.load %arg3[%c0_69, %c3, %c0_70] : memref<1x5x128xf32, #tpu.memory_space<vmem>>, vector<1x1x128xf32>
    %183 = vector.shape_cast %182 : vector<1x1x128xf32> to vector<1x128xf32>
    %184 = vector.shape_cast %181 : vector<1x128xf32> to vector<1x1x128xf32>
    tpu.vector_store %arg3[%c0_69, %c3, %c0_70], %184 {strides = array<i32>} : memref<1x5x128xf32, #tpu.memory_space<vmem>>, vector<1x1x128xf32>,
    %cst_71 = arith.constant dense<0.000000e+00> : vector<128xf32>
    %185 = vector.multi_reduction <add>, %162, %cst_71 [0] : vector<32x128xf32> to vector<128xf32>
    %186 = vector.shape_cast %185 : vector<128xf32> to vector<1x128xf32>
    %c0_72 = arith.constant 0 : index
    %c4 = arith.constant 4 : index
    %c0_73 = arith.constant 0 : index
    %187 = vector.load %arg3[%c0_72, %c4, %c0_73] : memref<1x5x128xf32, #tpu.memory_space<vmem>>, vector<1x1x128xf32>
    %188 = vector.shape_cast %187 : vector<1x1x128xf32> to vector<1x128xf32>
    %189 = vector.shape_cast %186 : vector<1x128xf32> to vector<1x1x128xf32>
    tpu.vector_store %arg3[%c0_72, %c4, %c0_73], %189 {strides = array<i32>} : memref<1x5x128xf32, #tpu.memory_space<vmem>>, vector<1x1x128xf32>,
    return
  }
  func.func @transform_0(%arg0: i32) -> (i32, i32) {
    %c0_i32 = arith.constant 0 : i32
    %c0_i32_0 = arith.constant 0 : i32
    return %arg0, %c0_i32 : i32, i32
  }
  func.func @transform_1(%arg0: i32) -> (i32, i32) {
    %c0_i32 = arith.constant 0 : i32
    %c0_i32_0 = arith.constant 0 : i32
    return %arg0, %c0_i32 : i32, i32
  }
  func.func @transform_2(%arg0: i32) -> (i32, i32, i32) {
    %c0_i32 = arith.constant 0 : i32
    %c0_i32_0 = arith.constant 0 : i32
    %c0_i32_1 = arith.constant 0 : i32
    return %arg0, %c0_i32, %c0_i32_0 : i32, i32, i32
  }
}

</mosaic_0001>

<llo_original>
// kernel: tpu_custom_call.1
$region0: #{tpu_custom_call.1}
  #allocation0 [shape = 'u32[]', space=smem, size = 0x4, offset = 0x4, fixed_abs, tag = 'smem constant byte address 0x4 - core index']
  #allocation1 [shape = 'u32[144,128]{1,0:T(1,128)}', space=vmem, size = 0x12000, scoped, tag = 'internal scratch']
  %s0 = inlined_call_operand.hbm [shape: f32[72,128], index: 0, kind: input, shape index: {}]
  %s1 = inlined_call_operand.hbm [shape: s8[72,128], index: 1, kind: input, shape index: {}]
  %s2 = inlined_call_operand.vmem [shape: f32[2,5,128], index: 2, kind: output, shape index: {}]
  %s3 = sld [smem:[#allocation0]]
  $region49: #{tpu_custom_call.1} parent=0
    _
  %s5 = ssub.s32 1, %s3
  %s6 = scalar_select 0, %s5, %s3
  $region1: #{tpu_custom_call.1} parent=0
    #allocation2 [shape = 'u8[32768]{0}', space=vmem, size = 0x8000, scoped, tag = 'input window, operand 0']
    #allocation3 [shape = 's32[2]{0}', space=sflag, size = 0x8, scoped, tag = 'scoped memory for tpu_custom_call.1']
    #allocation4 [shape = 'u8[8192]{0}', space=vmem, size = 0x2000, scoped, tag = 'input window, operand 1']
    #allocation5 [shape = 's32[2]{0}', space=sflag, size = 0x8, scoped, tag = 'scoped memory for tpu_custom_call.1']
    %7 = vsyncpa [#allocation3], 0
    %s8 = scalar_lea.sflag [#allocation3], 1
    %9 = vsyncpa %s8, 0
    %10 = vsyncpa [#allocation5], 0
    %s11 = scalar_lea.sflag [#allocation5], 1
    %12 = vsyncpa %s11, 0
    loop: start=0, step=1, limit=4
    $region2: #{tpu_custom_call.1} parent=1 // loop_pre_header
      _
    $region3: #{tpu_custom_call.1} parent=1 // loop_header
      %s14 = sphi 0, %s18
      %p15 = scmp.ge.s32.totalorder %s14, 4
      %s24 = sphi 0, %s26
      %s27 = sphi 0, %s24
      %s28 = sphi 0, %s27
      %s44 = sphi 0, %s28
      %s50 = sphi 0, %s52
      %s53 = sphi 0, %s50
      %s54 = sphi 0, %s53
      %s70 = sphi 0, %s54
      %s76 = sphi 0, %s78
      %s79 = sphi 0, %s76
      %s80 = sphi 0, %s79
      %s96 = sphi 0, %s80
    $region4: #{tpu_custom_call.1} parent=1 // loop_header_branch
      %17 = sbr.rel (%p15) target = $region8
    $region5: #{tpu_custom_call.1} parent=1 // loop_body
      %s19 = ssub.s32 %s14, 1
      %s20 = ssub.s32 %s14, 2
      %s21 = sadd.s32 %s14, 1
      %s22 = ssub.s32 %s14, %s21
      %p23 = scmp.eq.s32.totalorder %s22, 0
      %s25 = sadd.s32 %s24, 1
      %s26 = scalar_select %p23, %s24, %s25
      %p29 = pneg %p23
      %p30 = scmp.eq.s32.totalorder %s14, 1
      %p31 = por %p29, %p30
      %p32 = scmp.ne.s32.totalorder %s24, %s27
      %p33 = scmp.eq.s32.totalorder %s14, 0
      %p34 = por %p32, %p33
      %p35 = scmp.ne.s32.totalorder %s24, %s27
      %p36 = scmp.eq.s32.totalorder %s19, 1
      %p37 = por %p35, %p36
      %p38 = scmp.ne.s32.totalorder %s27, %s28
      %p39 = scmp.eq.s32.totalorder %s19, 0
      %p40 = por %p38, %p39
      %p41 = scmp.ne.s32.totalorder %s27, %s28
      %p42 = scmp.eq.s32.totalorder %s20, 1
      %p43 = por %p41, %p42
      %p45 = scmp.ne.s32.totalorder %s28, %s44
      %p46 = scmp.eq.s32.totalorder %s20, 0
      %p47 = por %p45, %p46
      %s48 = ssub.s32 %s14, %s21
      %p49 = scmp.eq.s32.totalorder %s48, 0
      %s51 = sadd.s32 %s50, 1
      %s52 = scalar_select %p49, %s50, %s51
      %p55 = pneg %p49
      %p56 = scmp.eq.s32.totalorder %s14, 1
      %p57 = por %p55, %p56
      %p58 = scmp.ne.s32.totalorder %s50, %s53
      %p59 = scmp.eq.s32.totalorder %s14, 0
      %p60 = por %p58, %p59
      %p61 = scmp.ne.s32.totalorder %s50, %s53
      %p62 = scmp.eq.s32.totalorder %s19, 1
      %p63 = por %p61, %p62
      %p64 = scmp.ne.s32.totalorder %s53, %s54
      %p65 = scmp.eq.s32.totalorder %s19, 0
      %p66 = por %p64, %p65
      %p67 = scmp.ne.s32.totalorder %s53, %s54
      %p68 = scmp.eq.s32.totalorder %s20, 1
      %p69 = por %p67, %p68
      %p71 = scmp.ne.s32.totalorder %s54, %s70
      %p72 = scmp.eq.s32.totalorder %s20, 0
      %p73 = por %p71, %p72
      %s74 = ssub.s32 %s14, %s21
      %p75 = scmp.eq.s32.totalorder %s74, 0
      %s77 = sadd.s32 %s76, 1
      %s78 = scalar_select %p75, %s76, %s77
      %p81 = pneg %p75
      %p82 = scmp.eq.s32.totalorder %s14, 1
      %p83 = por %p81, %p82
      %p84 = scmp.ne.s32.totalorder %s76, %s79
      %p85 = scmp.eq.s32.totalorder %s14, 0
      %p86 = por %p84, %p85
      %p87 = scmp.ne.s32.totalorder %s76, %s79
      %p88 = scmp.eq.s32.totalorder %s19, 1
      %p89 = por %p87, %p88
      %p90 = scmp.ne.s32.totalorder %s79, %s80
      %p91 = scmp.eq.s32.totalorder %s19, 0
      %p92 = por %p90, %p91
      %p93 = scmp.ne.s32.totalorder %s79, %s80
      %p94 = scmp.eq.s32.totalorder %s20, 1
      %p95 = por %p93, %p94
      %p97 = scmp.ne.s32.totalorder %s80, %s96
      %p98 = scmp.eq.s32.totalorder %s20, 0
      %p99 = por %p97, %p98
      %p100 = scmp.le.s32.totalorder 1, %s14
      %p101 = scmp.lt.s32.totalorder %s14, 3
      %p102 = pnand %p100, %p101
      %p103 = pneg %p102
      // Predicated region
      $region9: #{tpu_custom_call.1} parent=5 // pred_check
        _
      $region10: #{tpu_custom_call.1} parent=5 // pred_check_branch
        %105 = sbr.rel (%p102) target = $region12
      $region11: #{tpu_custom_call.1} parent=5 // pred_region
        %s106 = ssub.s32 %s14, 1
      $region12: #{tpu_custom_call.1} parent=5 // pred_fallthru
        _
      %p107 = scmp.lt.s32.totalorder %s14, 2
      // Predicated region
      $region13: #{tpu_custom_call.1} parent=5 // pred_check
        %p108 = pneg %p107
      $region14: #{tpu_custom_call.1} parent=5 // pred_check_branch
        %110 = sbr.rel (%p108) target = $region16
      $region15: #{tpu_custom_call.1} parent=5 // pred_region
        // Predicated region
        $region17: #{tpu_custom_call.1} parent=15 // pred_check
          %p111 = pneg %p34
        $region18: #{tpu_custom_call.1} parent=15 // pred_check_branch
          %113 = sbr.rel (%p111) target = $region20
        $region19: #{tpu_custom_call.1} parent=15 // pred_region
          %s114 = sand.u32 %s24, 1
          %s115 = scalar_lea.sflag [#allocation3], %s114
          %s116 = sand.u32 %s24, 1
          %s117 = smul.addr %s116, 32
          %s118 = scalar_lea.vmem [#allocation2], %s117
          %s119 = smul.u32 4, %s14
          %s120 = ssub.s32 9, %s119
          %p121 = scmp.lt.s32.totalorder %s120, 4
          %s122 = scalar_select %p121, %s120, 4
          %s123 = smul.u32 128, %s122
          %s125 = ssub.s32 512, %s123
          %126 = vsyncadd %s115, %s125
          %p127 = scmp.ne.s32.totalorder 0, %s123
          %s128 = smul.addr %s119, 128
          %s129 = scalar_lea.hbm %s0, %s128
          %s130 = smul.u32 8, %s122
          %s131 = sshll.u32 %s118, 4
          %s132 = int_to_ptr.vmem [resolvable:$true] %s131
          %s133 = sshll.u32 %s130, 4
          %137 = dma.hbm_to_vmem [thread:$0]  (%p127), %s129, %s133, %s132, %s115, 128, 128, 8
        $region20: #{tpu_custom_call.1} parent=15 // pred_fallthru
          _
        // Predicated region
        $region21: #{tpu_custom_call.1} parent=15 // pred_check
          %p138 = pneg %p60
        $region22: #{tpu_custom_call.1} parent=15 // pred_check_branch
          %140 = sbr.rel (%p138) target = $region24
        $region23: #{tpu_custom_call.1} parent=15 // pred_region
          %s141 = sand.u32 %s50, 1
          %s142 = scalar_lea.sflag [#allocation5], %s141
          %s143 = sand.u32 %s50, 1
          %s144 = smul.addr %s143, 8
          %s145 = scalar_lea.vmem [#allocation4], %s144
          %s146 = smul.u32 4, %s14
          %s147 = ssub.s32 9, %s146
          %p148 = scmp.lt.s32.totalorder %s147, 4
          %s149 = scalar_select %p148, %s147, 4
          %s150 = smul.u32 32, %s149
          %s152 = ssub.s32 128, %s150
          %153 = vsyncadd %s142, %s152
          %p154 = scmp.ne.s32.totalorder 0, %s150
          %s155 = smul.addr %s146, 32
          %s156 = scalar_lea.hbm %s1, %s155
          %s157 = smul.u32 2, %s149
          %s158 = sshll.u32 %s145, 4
          %s159 = int_to_ptr.vmem [resolvable:$true] %s158
          %s160 = sshll.u32 %s157, 4
          %164 = dma.hbm_to_vmem [thread:$0]  (%p154), %s156, %s160, %s159, %s142, 32, 32, 2
        $region24: #{tpu_custom_call.1} parent=15 // pred_fallthru
          _
      $region16: #{tpu_custom_call.1} parent=5 // pred_fallthru
        _
      %p165 = scmp.le.s32.totalorder 1, %s14
      %p166 = scmp.lt.s32.totalorder %s14, 3
      %p167 = pnand %p165, %p166
      %p168 = pneg %p167
      // Predicated region
      $region25: #{tpu_custom_call.1} parent=5 // pred_check
        _
      $region26: #{tpu_custom_call.1} parent=5 // pred_check_branch
        %170 = sbr.rel (%p167) target = $region28
      $region27: #{tpu_custom_call.1} parent=5 // pred_region
        %s171 = ssub.s32 %s14, 1
        %s172 = sand.u32 %s27, 1
        %s173 = scalar_lea.sflag [#allocation3], %s172
        %s174 = sand.u32 %s27, 1
        %s175 = smul.addr %s174, 32
        %s176 = scalar_lea.vmem [#allocation2], %s175
        // Predicated region
        $region29: #{tpu_custom_call.1} parent=27 // pred_check
          %p177 = pneg %p40
        $region30: #{tpu_custom_call.1} parent=27 // pred_check_branch
          %179 = sbr.rel (%p177) target = $region32
        $region31: #{tpu_custom_call.1} parent=27 // pred_region
          %180 = dma.done %s173, 512
        $region32: #{tpu_custom_call.1} parent=27 // pred_fallthru
          _
        %s181 = sand.u32 %s53, 1
        %s182 = scalar_lea.sflag [#allocation5], %s181
        %s183 = sand.u32 %s53, 1
        %s184 = smul.addr %s183, 8
        %s185 = scalar_lea.vmem [#allocation4], %s184
        // Predicated region
        $region33: #{tpu_custom_call.1} parent=27 // pred_check
          %p186 = pneg %p66
        $region34: #{tpu_custom_call.1} parent=27 // pred_check_branch
          %188 = sbr.rel (%p186) target = $region36
        $region35: #{tpu_custom_call.1} parent=27 // pred_region
          %189 = dma.done %s182, 128
        $region36: #{tpu_custom_call.1} parent=27 // pred_fallthru
          _
        %s190 = sand.u32 %s27, 1
        %s191 = scalar_lea.sflag [#allocation3], %s190
        %s192 = sand.u32 %s27, 1
        %s193 = smul.addr %s192, 32
        %s194 = scalar_lea.vmem [#allocation2], %s193
        %p195 = pneg %p40
        %p196 = pneg %p37
        %s197 = sand.u32 %s53, 1
        %s198 = scalar_lea.sflag [#allocation5], %s197
        %s199 = sand.u32 %s53, 1
        %s200 = smul.addr %s199, 8
        %s201 = scalar_lea.vmem [#allocation4], %s200
        %p202 = pneg %p66
        %p203 = pneg %p63
        %p204 = pneg %p92
        %p205 = pneg %p89
        %p206 = scmp.lt.s32.totalorder %s19, 1
        %s207 = scalar_select %p206, %s19, 1
        %s208 = smul.addr %s207, 8
        %s209 = scalar_lea.vmem %s2, %s208
        %s210 = smul.u32 4, %s19
        %s211 = ssub.s32 9, %s210
        %p212 = scmp.lt.s32.totalorder %s211, 4
        %s213 = scalar_select %p212, %s211, 4
        %s214 = smul.u32 128, %s213
        %s215 = smul.u32 4, %s19
        %s216 = ssub.s32 9, %s215
        %p217 = scmp.lt.s32.totalorder %s216, 4
        %s218 = scalar_select %p217, %s216, 4
        %s219 = smul.u32 32, %s218
        %p220 = scmp.lt.s32.totalorder %s19, 1
        %s221 = scalar_select %p220, %s19, 1
        %s222 = smul.addr %s221, 8
        %s223 = scalar_lea.vmem %s2, %s222
        %v224 = vld [vmem:[%s176] sm:$0xff]
        %v225 = vld [vmem:[%s176 + $0x8] sm:$0xff]
        %v226 = vld [vmem:[%s176 + $0x10] sm:$0xff]
        %v227 = vld [vmem:[%s176 + $0x18] sm:$0xff]
        %v228 = vld [vmem:[%s185] sm:$0x3]
        %v229 = vld [vmem:[%s185 + $0x2] sm:$0x3]
        %v230 = vld [vmem:[%s185 + $0x4] sm:$0x3]
        %v231 = vld [vmem:[%s185 + $0x6] sm:$0x3]
        %v232 = vunpack.c.0.s8 %v228
        %v233 = vunpack.c.0.s8 %v229
        %v234 = vunpack.c.0.s8 %v230
        %v235 = vunpack.c.0.s8 %v231
        %v236 = vcvt.s32.f32 %v232
        %v237 = vcvt.s32.f32 %v233
        %v238 = vcvt.s32.f32 %v234
        %v239 = vcvt.s32.f32 %v235
        %v240 = vlaneseq
        %v241 = vand.u32 %v240, 127
        %v242 = vcvt.s32.f32 %v241
        %vm243 = vcmp.ne.f32.partialorder %v236, 0.0
        %vm244 = vcmp.ne.f32.partialorder %v237, 0.0
        %vm245 = vcmp.ne.f32.partialorder %v238, 0.0
        %vm246 = vcmp.ne.f32.partialorder %v239, 0.0
        %v247 = vsel %vm243, 1, 0
        %v248 = vsel %vm244, 1, 0
        %v249 = vsel %vm245, 1, 0
        %v250 = vsel %vm246, 1, 0
        %v251 = vcvt.s32.f32 %v247
        %v252 = vcvt.s32.f32 %v248
        %v253 = vcvt.s32.f32 %v249
        %v254 = vcvt.s32.f32 %v250
        %vm255 = vcmp.ge.f32.partialorder %v242, 1.0
        %256 = vrot.lane.b32.xlu0 %v251, 1
        %v257 = vpop.permute.xlu0 %256
        %258 = vrot.lane.b32.xlu0 %v252, 1
        %v259 = vpop.permute.xlu0 %258
        %260 = vrot.lane.b32.xlu0 %v253, 1
        %v261 = vpop.permute.xlu0 %260
        %262 = vrot.lane.b32.xlu0 %v254, 1
        %v263 = vpop.permute.xlu0 %262
        %v264 = vsel %vm255, %v257, 0.0
        %v265 = vsel %vm255, %v259, 0.0
        %v266 = vsel %vm255, %v261, 0.0
        %v267 = vsel %vm255, %v263, 0.0
        %vm268 = vcmp.lt.f32.partialorder %v242, 127.0
        %269 = vrot.lane.b32.xlu0 %v251, 127
        %v270 = vpop.permute.xlu0 %269
        %271 = vrot.lane.b32.xlu0 %v252, 127
        %v272 = vpop.permute.xlu0 %271
        %273 = vrot.lane.b32.xlu0 %v253, 127
        %v274 = vpop.permute.xlu0 %273
        %275 = vrot.lane.b32.xlu0 %v254, 127
        %v276 = vpop.permute.xlu0 %275
        %v277 = vsel %vm268, %v270, 0.0
        %v278 = vsel %vm268, %v272, 0.0
        %v279 = vsel %vm268, %v274, 0.0
        %v280 = vsel %vm268, %v276, 0.0
        %vm281 = vcmp.eq.f32.partialorder %v264, 0.0
        %vm282 = vcmp.eq.f32.partialorder %v265, 0.0
        %vm283 = vcmp.eq.f32.partialorder %v266, 0.0
        %vm284 = vcmp.eq.f32.partialorder %v267, 0.0
        %vm285 = vmand %vm243, %vm281
        %vm286 = vmand %vm244, %vm282
        %vm287 = vmand %vm245, %vm283
        %vm288 = vmand %vm246, %vm284
        %vm289 = vcmp.eq.f32.partialorder %v277, 0.0
        %vm290 = vcmp.eq.f32.partialorder %v278, 0.0
        %vm291 = vcmp.eq.f32.partialorder %v279, 0.0
        %vm292 = vcmp.eq.f32.partialorder %v280, 0.0
        %vm293 = vmand %vm243, %vm289
        %vm294 = vmand %vm244, %vm290
        %vm295 = vmand %vm245, %vm291
        %vm296 = vmand %vm246, %vm292
        %v297 = vsel %vm285, %v242, -1.0
        %v298 = vsel %vm286, %v242, -1.0
        %v299 = vsel %vm287, %v242, -1.0
        %v300 = vsel %vm288, %v242, -1.0
        %v301 = vsel %vm293, %v242, 128.0
        %v302 = vsel %vm294, %v242, 128.0
        %v303 = vsel %vm295, %v242, 128.0
        %v304 = vsel %vm296, %v242, 128.0
        %305 = vrot.lane.b32.xlu0 %v297, 1
        %v306 = vpop.permute.xlu0 %305
        %307 = vrot.lane.b32.xlu0 %v298, 1
        %v308 = vpop.permute.xlu0 %307
        %309 = vrot.lane.b32.xlu0 %v299, 1
        %v310 = vpop.permute.xlu0 %309
        %311 = vrot.lane.b32.xlu0 %v300, 1
        %v312 = vpop.permute.xlu0 %311
        %v313 = vsel %vm255, %v306, -1.0
        %v314 = vsel %vm255, %v308, -1.0
        %v315 = vsel %vm255, %v310, -1.0
        %v316 = vsel %vm255, %v312, -1.0
        %v317 = vmax.f32 %v297, %v313
        %v318 = vmax.f32 %v298, %v314
        %v319 = vmax.f32 %v299, %v315
        %v320 = vmax.f32 %v300, %v316
        %321 = vrot.lane.b32.xlu0 %v301, 127
        %v322 = vpop.permute.xlu0 %321
        %323 = vrot.lane.b32.xlu0 %v302, 127
        %v324 = vpop.permute.xlu0 %323
        %325 = vrot.lane.b32.xlu0 %v303, 127
        %v326 = vpop.permute.xlu0 %325
        %327 = vrot.lane.b32.xlu0 %v304, 127
        %v328 = vpop.permute.xlu0 %327
        %v329 = vsel %vm268, %v322, 128.0
        %v330 = vsel %vm268, %v324, 128.0
        %v331 = vsel %vm268, %v326, 128.0
        %v332 = vsel %vm268, %v328, 128.0
        %v333 = vmin.f32 %v301, %v329
        %v334 = vmin.f32 %v302, %v330
        %v335 = vmin.f32 %v303, %v331
        %v336 = vmin.f32 %v304, %v332
        %vm337 = vcmp.ge.f32.partialorder %v242, 2.0
        %338 = vrot.lane.b32.xlu0 %v317, 2
        %v339 = vpop.permute.xlu0 %338
        %340 = vrot.lane.b32.xlu0 %v318, 2
        %v341 = vpop.permute.xlu0 %340
        %342 = vrot.lane.b32.xlu0 %v319, 2
        %v343 = vpop.permute.xlu0 %342
        %344 = vrot.lane.b32.xlu0 %v320, 2
        %v345 = vpop.permute.xlu0 %344
        %v346 = vsel %vm337, %v339, -1.0
        %v347 = vsel %vm337, %v341, -1.0
        %v348 = vsel %vm337, %v343, -1.0
        %v349 = vsel %vm337, %v345, -1.0
        %v350 = vmax.f32 %v317, %v346
        %v351 = vmax.f32 %v318, %v347
        %v352 = vmax.f32 %v319, %v348
        %v353 = vmax.f32 %v320, %v349
        %vm354 = vcmp.lt.f32.partialorder %v242, 126.0
        %355 = vrot.lane.b32.xlu0 %v333, 126
        %v356 = vpop.permute.xlu0 %355
        %357 = vrot.lane.b32.xlu0 %v334, 126
        %v358 = vpop.permute.xlu0 %357
        %359 = vrot.lane.b32.xlu0 %v335, 126
        %v360 = vpop.permute.xlu0 %359
        %361 = vrot.lane.b32.xlu0 %v336, 126
        %v362 = vpop.permute.xlu0 %361
        %v363 = vsel %vm354, %v356, 128.0
        %v364 = vsel %vm354, %v358, 128.0
        %v365 = vsel %vm354, %v360, 128.0
        %v366 = vsel %vm354, %v362, 128.0
        %v367 = vmin.f32 %v333, %v363
        %v368 = vmin.f32 %v334, %v364
        %v369 = vmin.f32 %v335, %v365
        %v370 = vmin.f32 %v336, %v366
        %vm371 = vcmp.ge.f32.partialorder %v242, 4.0
        %372 = vrot.lane.b32.xlu0 %v350, 4
        %v373 = vpop.permute.xlu0 %372
        %374 = vrot.lane.b32.xlu0 %v351, 4
        %v375 = vpop.permute.xlu0 %374
        %376 = vrot.lane.b32.xlu0 %v352, 4
        %v377 = vpop.permute.xlu0 %376
        %378 = vrot.lane.b32.xlu0 %v353, 4
        %v379 = vpop.permute.xlu0 %378
        %v380 = vsel %vm371, %v373, -1.0
        %v381 = vsel %vm371, %v375, -1.0
        %v382 = vsel %vm371, %v377, -1.0
        %v383 = vsel %vm371, %v379, -1.0
        %v384 = vmax.f32 %v350, %v380
        %v385 = vmax.f32 %v351, %v381
        %v386 = vmax.f32 %v352, %v382
        %v387 = vmax.f32 %v353, %v383
        %vm388 = vcmp.lt.f32.partialorder %v242, 124.0
        %389 = vrot.lane.b32.xlu0 %v367, 124
        %v390 = vpop.permute.xlu0 %389
        %391 = vrot.lane.b32.xlu0 %v368, 124
        %v392 = vpop.permute.xlu0 %391
        %393 = vrot.lane.b32.xlu0 %v369, 124
        %v394 = vpop.permute.xlu0 %393
        %395 = vrot.lane.b32.xlu0 %v370, 124
        %v396 = vpop.permute.xlu0 %395
        %v397 = vsel %vm388, %v390, 128.0
        %v398 = vsel %vm388, %v392, 128.0
        %v399 = vsel %vm388, %v394, 128.0
        %v400 = vsel %vm388, %v396, 128.0
        %v401 = vmin.f32 %v367, %v397
        %v402 = vmin.f32 %v368, %v398
        %v403 = vmin.f32 %v369, %v399
        %v404 = vmin.f32 %v370, %v400
        %vm405 = vcmp.ge.f32.partialorder %v242, 8.0
        %406 = vrot.lane.b32.xlu0 %v384, 8
        %v407 = vpop.permute.xlu0 %406
        %408 = vrot.lane.b32.xlu0 %v385, 8
        %v409 = vpop.permute.xlu0 %408
        %410 = vrot.lane.b32.xlu0 %v386, 8
        %v411 = vpop.permute.xlu0 %410
        %412 = vrot.lane.b32.xlu0 %v387, 8
        %v413 = vpop.permute.xlu0 %412
        %v414 = vsel %vm405, %v407, -1.0
        %v415 = vsel %vm405, %v409, -1.0
        %v416 = vsel %vm405, %v411, -1.0
        %v417 = vsel %vm405, %v413, -1.0
        %v418 = vmax.f32 %v384, %v414
        %v419 = vmax.f32 %v385, %v415
        %v420 = vmax.f32 %v386, %v416
        %v421 = vmax.f32 %v387, %v417
        %vm422 = vcmp.lt.f32.partialorder %v242, 120.0
        %423 = vrot.lane.b32.xlu0 %v401, 120
        %v424 = vpop.permute.xlu0 %423
        %425 = vrot.lane.b32.xlu0 %v402, 120
        %v426 = vpop.permute.xlu0 %425
        %427 = vrot.lane.b32.xlu0 %v403, 120
        %v428 = vpop.permute.xlu0 %427
        %429 = vrot.lane.b32.xlu0 %v404, 120
        %v430 = vpop.permute.xlu0 %429
        %v431 = vsel %vm422, %v424, 128.0
        %v432 = vsel %vm422, %v426, 128.0
        %v433 = vsel %vm422, %v428, 128.0
        %v434 = vsel %vm422, %v430, 128.0
        %v435 = vmin.f32 %v401, %v431
        %v436 = vmin.f32 %v402, %v432
        %v437 = vmin.f32 %v403, %v433
        %v438 = vmin.f32 %v404, %v434
        %vm439 = vcmp.ge.f32.partialorder %v242, 16.0
        %440 = vrot.lane.b32.xlu0 %v418, 16
        %v441 = vpop.permute.xlu0 %440
        %442 = vrot.lane.b32.xlu0 %v419, 16
        %v443 = vpop.permute.xlu0 %442
        %444 = vrot.lane.b32.xlu0 %v420, 16
        %v445 = vpop.permute.xlu0 %444
        %446 = vrot.lane.b32.xlu0 %v421, 16
        %v447 = vpop.permute.xlu0 %446
        %v448 = vsel %vm439, %v441, -1.0
        %v449 = vsel %vm439, %v443, -1.0
        %v450 = vsel %vm439, %v445, -1.0
        %v451 = vsel %vm439, %v447, -1.0
        %v452 = vmax.f32 %v418, %v448
        %v453 = vmax.f32 %v419, %v449
        %v454 = vmax.f32 %v420, %v450
        %v455 = vmax.f32 %v421, %v451
        %vm456 = vcmp.lt.f32.partialorder %v242, 112.0
        %457 = vrot.lane.b32.xlu0 %v435, 112
        %v458 = vpop.permute.xlu0 %457
        %459 = vrot.lane.b32.xlu0 %v436, 112
        %v460 = vpop.permute.xlu0 %459
        %461 = vrot.lane.b32.xlu0 %v437, 112
        %v462 = vpop.permute.xlu0 %461
        %463 = vrot.lane.b32.xlu0 %v438, 112
        %v464 = vpop.permute.xlu0 %463
        %v465 = vsel %vm456, %v458, 128.0
        %v466 = vsel %vm456, %v460, 128.0
        %v467 = vsel %vm456, %v462, 128.0
        %v468 = vsel %vm456, %v464, 128.0
        %v469 = vmin.f32 %v435, %v465
        %v470 = vmin.f32 %v436, %v466
        %v471 = vmin.f32 %v437, %v467
        %v472 = vmin.f32 %v438, %v468
        %vm473 = vcmp.ge.f32.partialorder %v242, 32.0
        %474 = vrot.lane.b32.xlu0 %v452, 32
        %v475 = vpop.permute.xlu0 %474
        %476 = vrot.lane.b32.xlu0 %v453, 32
        %v477 = vpop.permute.xlu0 %476
        %478 = vrot.lane.b32.xlu0 %v454, 32
        %v479 = vpop.permute.xlu0 %478
        %480 = vrot.lane.b32.xlu0 %v455, 32
        %v481 = vpop.permute.xlu0 %480
        %v482 = vsel %vm473, %v475, -1.0
        %v483 = vsel %vm473, %v477, -1.0
        %v484 = vsel %vm473, %v479, -1.0
        %v485 = vsel %vm473, %v481, -1.0
        %v486 = vmax.f32 %v452, %v482
        %v487 = vmax.f32 %v453, %v483
        %v488 = vmax.f32 %v454, %v484
        %v489 = vmax.f32 %v455, %v485
        %vm490 = vcmp.lt.f32.partialorder %v242, 96.0
        %491 = vrot.lane.b32.xlu0 %v469, 96
        %v492 = vpop.permute.xlu0 %491
        %493 = vrot.lane.b32.xlu0 %v470, 96
        %v494 = vpop.permute.xlu0 %493
        %495 = vrot.lane.b32.xlu0 %v471, 96
        %v496 = vpop.permute.xlu0 %495
        %497 = vrot.lane.b32.xlu0 %v472, 96
        %v498 = vpop.permute.xlu0 %497
        %v499 = vsel %vm490, %v492, 128.0
        %v500 = vsel %vm490, %v494, 128.0
        %v501 = vsel %vm490, %v496, 128.0
        %v502 = vsel %vm490, %v498, 128.0
        %v503 = vmin.f32 %v469, %v499
        %v504 = vmin.f32 %v470, %v500
        %v505 = vmin.f32 %v471, %v501
        %v506 = vmin.f32 %v472, %v502
        %vm507 = vcmp.ge.f32.partialorder %v242, 64.0
        %508 = vrot.lane.b32.xlu0 %v486, 64
        %v509 = vpop.permute.xlu0 %508
        %510 = vrot.lane.b32.xlu0 %v487, 64
        %v511 = vpop.permute.xlu0 %510
        %512 = vrot.lane.b32.xlu0 %v488, 64
        %v513 = vpop.permute.xlu0 %512
        %514 = vrot.lane.b32.xlu0 %v489, 64
        %v515 = vpop.permute.xlu0 %514
        %v516 = vsel %vm507, %v509, -1.0
        %v517 = vsel %vm507, %v511, -1.0
        %v518 = vsel %vm507, %v513, -1.0
        %v519 = vsel %vm507, %v515, -1.0
        %v520 = vmax.f32 %v486, %v516
        %v521 = vmax.f32 %v487, %v517
        %v522 = vmax.f32 %v488, %v518
        %v523 = vmax.f32 %v489, %v519
        %vm524 = vcmp.lt.f32.partialorder %v242, 64.0
        %525 = vrot.lane.b32.xlu0 %v503, 64
        %v526 = vpop.permute.xlu0 %525
        %527 = vrot.lane.b32.xlu0 %v504, 64
        %v528 = vpop.permute.xlu0 %527
        %529 = vrot.lane.b32.xlu0 %v505, 64
        %v530 = vpop.permute.xlu0 %529
        %531 = vrot.lane.b32.xlu0 %v506, 64
        %v532 = vpop.permute.xlu0 %531
        %v533 = vsel %vm524, %v526, 128.0
        %v534 = vsel %vm524, %v528, 128.0
        %v535 = vsel %vm524, %v530, 128.0
        %v536 = vsel %vm524, %v532, 128.0
        %v537 = vmin.f32 %v503, %v533
        %v538 = vmin.f32 %v504, %v534
        %v539 = vmin.f32 %v505, %v535
        %v540 = vmin.f32 %v506, %v536
        %v541 = vsub.f32 %v537, %v520
        %v542 = vsub.f32 %v538, %v521
        %v543 = vsub.f32 %v539, %v522
        %v544 = vsub.f32 %v540, %v523
        %v545 = vadd.f32 %v541, 1.0
        %v546 = vadd.f32 %v542, 1.0
        %v547 = vadd.f32 %v543, 1.0
        %v548 = vadd.f32 %v544, 1.0
        %v549 = vadd.f32 %v545, 0.5
        %v550 = vadd.f32 %v546, 0.5
        %v551 = vadd.f32 %v547, 0.5
        %v552 = vadd.f32 %v548, 0.5
        %v553 = vmul.f32 %v549, 0.16666667
        %v554 = vmul.f32 %v550, 0.16666667
        %v555 = vmul.f32 %v551, 0.16666667
        %v556 = vmul.f32 %v552, 0.16666667
        %v557 = vfloor.f32 %v553
        %v558 = vfloor.f32 %v554
        %v559 = vfloor.f32 %v555
        %v560 = vfloor.f32 %v556
        %vm561 = vcmp.gt.f32.partialorder %v520, 0.0
        %vm562 = vcmp.gt.f32.partialorder %v521, 0.0
        %vm563 = vcmp.gt.f32.partialorder %v522, 0.0
        %vm564 = vcmp.gt.f32.partialorder %v523, 0.0
        %vm565 = vcmp.lt.f32.partialorder %v537, 127.0
        %vm566 = vcmp.lt.f32.partialorder %v538, 127.0
        %vm567 = vcmp.lt.f32.partialorder %v539, 127.0
        %vm568 = vcmp.lt.f32.partialorder %v540, 127.0
        %vm569 = vmand %vm561, %vm565
        %vm570 = vmand %vm562, %vm566
        %vm571 = vmand %vm563, %vm567
        %vm572 = vmand %vm564, %vm568
        %v573 = vadd.f32 %v520, %v557
        %v574 = vadd.f32 %v521, %v558
        %v575 = vadd.f32 %v522, %v559
        %v576 = vadd.f32 %v523, %v560
        %vm577 = vcmp.ge.f32.partialorder %v242, %v573
        %vm578 = vcmp.ge.f32.partialorder %v242, %v574
        %vm579 = vcmp.ge.f32.partialorder %v242, %v575
        %vm580 = vcmp.ge.f32.partialorder %v242, %v576
        %v581 = vsub.f32 %v537, %v557
        %v582 = vsub.f32 %v538, %v558
        %v583 = vsub.f32 %v539, %v559
        %v584 = vsub.f32 %v540, %v560
        %vm585 = vcmp.le.f32.partialorder %v242, %v581
        %vm586 = vcmp.le.f32.partialorder %v242, %v582
        %vm587 = vcmp.le.f32.partialorder %v242, %v583
        %vm588 = vcmp.le.f32.partialorder %v242, %v584
        %vm589 = vmand %vm577, %vm585
        %vm590 = vmand %vm578, %vm586
        %vm591 = vmand %vm579, %vm587
        %vm592 = vmand %vm580, %vm588
        %vm593 = vmand %vm243, %vm569
        %vm594 = vmand %vm244, %vm570
        %vm595 = vmand %vm245, %vm571
        %vm596 = vmand %vm246, %vm572
        %vm597 = vmand %vm593, %vm589
        %vm598 = vmand %vm594, %vm590
        %vm599 = vmand %vm595, %vm591
        %vm600 = vmand %vm596, %vm592
        %v601 = vsel %vm597, 1.6, 1.0
        %v602 = vsel %vm598, 1.6, 1.0
        %v603 = vsel %vm599, 1.6, 1.0
        %v604 = vsel %vm600, 1.6, 1.0
        %v605 = vand.u32 2147483647, %v224
        %v606 = vand.u32 2147483647, %v225
        %v607 = vand.u32 2147483647, %v226
        %v608 = vand.u32 2147483647, %v227
        %v609 = vsub.f32 0.0, %v605
        %v610 = vsub.f32 0.0, %v606
        %v611 = vsub.f32 0.0, %v607
        %v612 = vsub.f32 0.0, %v608
        %v613 = vmul.f32 %v609, 1.442695
        %v614 = vpow.pop %v613
        %v615 = vmul.f32 %v610, 1.442695
        %v616 = vpow.pop %v615
        %v617 = vmul.f32 %v611, 1.442695
        %v618 = vpow.pop %v617
        %v619 = vmul.f32 %v612, 1.442695
        %v620 = vpow.pop %v619
        %v621 = vmax.f32 %v224, 0.0
        %v622 = vmax.f32 %v225, 0.0
        %v623 = vmax.f32 %v226, 0.0
        %v624 = vmax.f32 %v227, 0.0
        %v625 = vmul.f32 %v224, %v236
        %v626 = vmul.f32 %v225, %v237
        %v627 = vmul.f32 %v226, %v238
        %v628 = vmul.f32 %v227, %v239
        %v629 = vsub.f32 %v621, %v625
        %v630 = vsub.f32 %v622, %v626
        %v631 = vsub.f32 %v623, %v627
        %v632 = vsub.f32 %v624, %v628
        %v633 = vadd.f32 %v614, 1.0
        %v634 = vadd.f32 %v616, 1.0
        %v635 = vadd.f32 %v618, 1.0
        %v636 = vadd.f32 %v620, 1.0
        %v637 = vlog2.pop %v633
        %v638 = vmul.f32 %v637, 0.6931472
        %v639 = vlog2.pop %v634
        %v640 = vmul.f32 %v639, 0.6931472
        %v641 = vlog2.pop %v635
        %v642 = vmul.f32 %v641, 0.6931472
        %v643 = vlog2.pop %v636
        %v644 = vmul.f32 %v643, 0.6931472
        %v645 = vadd.f32 %v629, %v638
        %v646 = vadd.f32 %v630, %v640
        %v647 = vadd.f32 %v631, %v642
        %v648 = vadd.f32 %v632, %v644
        %vm649 = vcmp.ge.f32.partialorder %v224, 0.0
        %vm650 = vcmp.ge.f32.partialorder %v225, 0.0
        %vm651 = vcmp.ge.f32.partialorder %v226, 0.0
        %vm652 = vcmp.ge.f32.partialorder %v227, 0.0
        %v653 = vsel %vm649, 1.0, %v614
        %v654 = vsel %vm650, 1.0, %v616
        %v655 = vsel %vm651, 1.0, %v618
        %v656 = vsel %vm652, 1.0, %v620
        %v657 = vrcp.pop %v633
        %v658 = vrcp.pop %v634
        %v659 = vrcp.pop %v635
        %v660 = vrcp.pop %v636
        %v661 = vmul.f32 %v653, %v657
        %v662 = vmul.f32 %v654, %v658
        %v663 = vmul.f32 %v655, %v659
        %v664 = vmul.f32 %v656, %v660
        %665 = vrot.lane.b32.xlu0 %v224, 1
        %v666 = vpop.permute.xlu0 %665
        %667 = vrot.lane.b32.xlu0 %v225, 1
        %v668 = vpop.permute.xlu0 %667
        %669 = vrot.lane.b32.xlu0 %v226, 1
        %v670 = vpop.permute.xlu0 %669
        %671 = vrot.lane.b32.xlu0 %v227, 1
        %v672 = vpop.permute.xlu0 %671
        %v673 = vsub.f32 %v224, %v666
        %v674 = vsub.f32 %v225, %v668
        %v675 = vsub.f32 %v226, %v670
        %v676 = vsub.f32 %v227, %v672
        %v677 = vand.u32 2147483647, %v673
        %v678 = vand.u32 2147483647, %v674
        %v679 = vand.u32 2147483647, %v675
        %v680 = vand.u32 2147483647, %v676
        %v681 = vsel %vm255, %v677, 0.0
        %v682 = vsel %vm255, %v678, 0.0
        %v683 = vsel %vm255, %v679, 0.0
        %v684 = vsel %vm255, %v680, 0.0
        %v685 = vmul.f32 %v601, %v645
        %v686 = vmul.f32 %v602, %v646
        %v687 = vmul.f32 %v603, %v647
        %v688 = vmul.f32 %v604, %v648
        %v689 = vmul.f32 %v661, %v236
        %v690 = vmul.f32 %v662, %v237
        %v691 = vmul.f32 %v663, %v238
        %v692 = vmul.f32 %v664, %v239
        %v693 = vadd.f32 %v685, %v686
        %v694 = vadd.f32 %v693, %v687
        %v695 = vadd.f32 %v694, %v688
        %v696 = vrot.slane %v695, 4
        %v697 = vadd.f32 %v695, %v696
        %v698 = vrot.slane %v697, 2
        %v699 = vadd.f32 %v697, %v698
        %v700 = vrot.slane %v699, 1
        %v701 = vadd.f32 %v699, %v700
        %702 = vst [vmem:[%s223] sm:$0x1] %v701
        %v703 = vadd.f32 %v661, %v662
        %v704 = vadd.f32 %v703, %v663
        %v705 = vadd.f32 %v704, %v664
        %v706 = vrot.slane %v705, 4
        %v707 = vadd.f32 %v705, %v706
        %v708 = vrot.slane %v707, 2
        %v709 = vadd.f32 %v707, %v708
        %v710 = vrot.slane %v709, 1
        %v711 = vadd.f32 %v709, %v710
        %712 = vst [vmem:[%s223 + $0x1] sm:$0x1] %v711
        %v713 = vadd.f32 %v236, %v237
        %v714 = vadd.f32 %v713, %v238
        %v715 = vadd.f32 %v714, %v239
        %v716 = vrot.slane %v715, 4
        %v717 = vadd.f32 %v715, %v716
        %v718 = vrot.slane %v717, 2
        %v719 = vadd.f32 %v717, %v718
        %v720 = vrot.slane %v719, 1
        %v721 = vadd.f32 %v719, %v720
        %722 = vst [vmem:[%s223 + $0x2] sm:$0x1] %v721
        %v723 = vadd.f32 %v689, %v690
        %v724 = vadd.f32 %v723, %v691
        %v725 = vadd.f32 %v724, %v692
        %v726 = vrot.slane %v725, 4
        %v727 = vadd.f32 %v725, %v726
        %v728 = vrot.slane %v727, 2
        %v729 = vadd.f32 %v727, %v728
        %v730 = vrot.slane %v729, 1
        %v731 = vadd.f32 %v729, %v730
        %732 = vst [vmem:[%s223 + $0x3] sm:$0x1] %v731
        %v733 = vadd.f32 %v681, %v682
        %v734 = vadd.f32 %v733, %v683
        %v735 = vadd.f32 %v734, %v684
        %v736 = vrot.slane %v735, 4
        %v737 = vadd.f32 %v735, %v736
        %v738 = vrot.slane %v737, 2
        %v739 = vadd.f32 %v737, %v738
        %v740 = vrot.slane %v739, 1
        %v741 = vadd.f32 %v739, %v740
        %742 = vst [vmem:[%s223 + $0x4] sm:$0x1] %v741
        %p743 = scmp.lt.s32.totalorder %s19, 1
        %s744 = scalar_select %p743, %s19, 1
        %s745 = smul.addr %s744, 8
        %s746 = scalar_lea.vmem %s2, %s745
        // Predicated region
        $region37: #{tpu_custom_call.1} parent=27 // pred_check
          %p747 = pneg %p89
        $region38: #{tpu_custom_call.1} parent=27 // pred_check_branch
          %749 = sbr.rel (%p747) target = $region40
        $region39: #{tpu_custom_call.1} parent=27 // pred_region
          _
        $region40: #{tpu_custom_call.1} parent=27 // pred_fallthru
          _
      $region28: #{tpu_custom_call.1} parent=5 // pred_fallthru
        _
      %p750 = scmp.le.s32.totalorder 2, %s14
      // Predicated region
      $region41: #{tpu_custom_call.1} parent=5 // pred_check
        %p751 = pneg %p750
      $region42: #{tpu_custom_call.1} parent=5 // pred_check_branch
        %753 = sbr.rel (%p751) target = $region44
      $region43: #{tpu_custom_call.1} parent=5 // pred_region
        %s754 = ssub.s32 %s14, 2
        // Predicated region
        $region45: #{tpu_custom_call.1} parent=43 // pred_check
          %p755 = pneg %p95
        $region46: #{tpu_custom_call.1} parent=43 // pred_check_branch
          %757 = sbr.rel (%p755) target = $region48
        $region47: #{tpu_custom_call.1} parent=43 // pred_region
          %p758 = scmp.lt.s32.totalorder %s20, 1
          %s759 = scalar_select %p758, %s20, 1
          %s760 = smul.addr %s759, 8
          %s761 = scalar_lea.vmem %s2, %s760
        $region48: #{tpu_custom_call.1} parent=43 // pred_fallthru
          _
      $region44: #{tpu_custom_call.1} parent=5 // pred_fallthru
        _
    $region6: #{tpu_custom_call.1} parent=1 // loop_footer
      %s18 = sadd.s32 1, %s14
    $region7: #{tpu_custom_call.1} parent=1 // loop_footer_branch
      %13 = sbr.rel target = $region3
    $region8: #{tpu_custom_call.1} parent=1 // loop_exit
      _
    %762 = vsyncpa [#allocation3], 1
    %s763 = scalar_lea.sflag [#allocation3], 1
    %764 = vsyncpa %s763, 1
    %765 = vsyncpa [#allocation5], 1
    %s766 = scalar_lea.sflag [#allocation5], 1
    %767 = vsyncpa %s766, 1

</llo_original>
